<compile_context>
chip_gen: v7x
topology: tpu7x:2x2x1
jax: 0.10.0
libtpu: 0.0.40
codegen_flags: <defaults>
</compile_context>

<pallas_src>
import functools

import jax
import jax.numpy as jnp
from jax.experimental import pallas as pl
from jax.experimental.pallas import tpu as pltpu


_STATS_W = 128  # lane-dense packed skinny outputs: lane0=c1, lane1=c2, lane2=r2


def _round_up(a: int, b: int) -> int:
    return (a + b - 1) // b * b


def _vp_time_kernel(params_ref, dth_ref, x_ref,
                    xhat_ref, res_ref, stats_ref, *, m, chunk):
    """One batch tile: trapezoid cumsum -> VP ('bernouli') basis -> 2x2 LS fit."""
    r = params_ref[0, 0]
    ny = params_ref[0, 1]

    x = x_ref[...]                       # (TB, P) f32, zero-padded past N
    dth = dth_ref[...]                   # (1, P)  f32, 0.5*dt, zero past M
    tb, p = x.shape

    # x_next[j] = x[j+1]  (last lane -> 0; also multiplied by dth == 0 there).
    x_next = jnp.concatenate(
        [x[:, 1:], jnp.zeros((tb, 1), jnp.float32)], axis=-1)

    # Trapezoid increments; zero for lanes >= M because dth is zero there.
    inc = dth * (x + x_next)             # (TB, P)

    # Inclusive prefix sum along lanes: chunked upper-tri matmuls + row carry.
    ii = jax.lax.broadcasted_iota(jnp.int32, (chunk, chunk), 0)
    jj = jax.lax.broadcasted_iota(jnp.int32, (chunk, chunk), 1)
    tri = (ii <= jj).astype(jnp.float32)          # (W, W), <= 256 KiB

    nchunks = p // chunk
    y_parts = []
    carry = None
    for c in range(nchunks):
        blk = inc[:, c * chunk:(c + 1) * chunk]                 # aligned slice
        yc = jnp.dot(blk, tri, preferred_element_type=jnp.float32)
        if carry is not None:
            yc = yc + carry
        y_parts.append(yc)
        if c + 1 < nchunks:
            s = jnp.sum(blk, axis=-1, keepdims=True)
            carry = s if carry is None else carry + s
    y = y_parts[0] if nchunks == 1 else jnp.concatenate(y_parts, axis=-1)

    # Variable-projection basis phi = [u, u^r], u = ny + cumulative integral,
    # masked to the valid M lanes so the Gram reductions ignore padding.
    lane = jax.lax.broadcasted_iota(jnp.int32, (1, p), 1)
    valid = lane < m
    u = ny + y
    u_safe = jnp.where(valid, u, 1.0)    # keep pow() NaN-free on padded lanes
    phi1 = jnp.where(valid, u, 0.0)
    phi2 = jnp.where(valid, jnp.power(u_safe, r), 0.0)   # single u^r pass (EUP)

    xt = x_next                          # fit target x[1:]; already 0 past M

    # coeffs = x @ pinv(phi); full-row-rank (2, M) phi -> 2x2 normal solve.
    g11 = jnp.sum(phi1 * phi1, axis=-1, keepdims=True)   # (TB, 1)
    g12 = jnp.sum(phi1 * phi2, axis=-1, keepdims=True)
    g22 = jnp.sum(phi2 * phi2, axis=-1, keepdims=True)
    b1 = jnp.sum(xt * phi1, axis=-1, keepdims=True)
    b2 = jnp.sum(xt * phi2, axis=-1, keepdims=True)

    det = g11 * g22 - g12 * g12
    # TODO(synk): rank-deficient phi (det ~ 0) -> torch pinv gives the
    # least-norm solution; here we only guard the divide against det == 0.
    safe_det = jnp.where(det == 0.0, 1.0, det)
    inv_det = pl.reciprocal(safe_det, approx=True)        # EUP slot, ~free
    c1 = (g22 * b1 - g12 * b2) * inv_det                  # (TB, 1)
    c2 = (g11 * b2 - g12 * b1) * inv_det

    x_hat = c1 * phi1 + c2 * phi2                         # (TB, P); 0 past M
    res = xt - x_hat
    r2 = jnp.sum(res * res, axis=-1, keepdims=True)       # (TB, 1)

    xhat_ref[...] = x_hat
    res_ref[...] = res

    # Pack skinny outputs into one lane-dense slab: [c1, c2, r2, 0, ...].
    slane = jax.lax.broadcasted_iota(jnp.int32, (1, _STATS_W), 1)
    stats_ref[...] = (jnp.where(slane == 0, c1, 0.0)
                      + jnp.where(slane == 1, c2, 0.0)
                      + jnp.where(slane == 2, r2, 0.0))


@jax.jit
def vp_layer_time_forward(x, t, params):
    """VPLayer_time.forward.  x: (B, 1, N), t: (N,), params: (2,) = [r, ny]."""
    B, C, N = x.shape
    assert C == 1, "VPFun_time squeezes a channel dim of 1"
    M = N - 1
    P = _round_up(N, 128)                       # shared lane-dense width

    # Batch tile: multiple of 8 sublanes, capped so ~16 live (TB, P) f32 slabs
    # (temporaries + double-buffered in/out blocks) stay under ~24 MiB.
    vmem_budget = 24 * 1024 * 1024
    per_row = 16 * P * 4
    tb_cap = max(8, min(128, (vmem_budget // per_row) // 8 * 8))
    TB = int(min(tb_cap, _round_up(B, 8)))
    B_pad = _round_up(B, TB)
    grid = (B_pad // TB,)

    chunk = 256 if (P % 256 == 0) else 128      # 256x256 MXU on v6e/v7x

    x2d = x.reshape(B, N).astype(jnp.float32)
    x_pad = jnp.pad(x2d, ((0, B_pad - B), (0, P - N)))
    t1 = t.reshape(N).astype(jnp.float32)
    dth = 0.5 * (t1[1:] - t1[:-1])              # precomputed in the wrapper
    dth = jnp.pad(dth, (0, P - M)).reshape(1, P)
    p2d = params.reshape(1, 2).astype(jnp.float32)

    kernel = functools.partial(_vp_time_kernel, m=M, chunk=chunk)

    xhat_p, res_p, stats = pl.pallas_call(
        kernel,
        out_shape=(
            jax.ShapeDtypeStruct((B_pad, P), jnp.float32),
            jax.ShapeDtypeStruct((B_pad, P), jnp.float32),
            jax.ShapeDtypeStruct((B_pad, _STATS_W), jnp.float32),
        ),
        grid=grid,
        in_specs=[
            pl.BlockSpec((1, 2), lambda i: (0, 0),
                         memory_space=pltpu.MemorySpace.SMEM),   # [r, ny]
            pl.BlockSpec((1, P), lambda i: (0, 0)),              # 0.5*dt
            pl.BlockSpec((TB, P), lambda i: (i, 0)),             # x batch tile
        ],
        out_specs=(
            pl.BlockSpec((TB, P), lambda i: (i, 0)),             # x_hat
            pl.BlockSpec((TB, P), lambda i: (i, 0)),             # res
            pl.BlockSpec((TB, _STATS_W), lambda i: (i, 0)),      # packed stats
        ),
        compiler_params=pltpu.CompilerParams(
            dimension_semantics=("parallel",),   # shard batch across v7x's 2 TCs
            vmem_limit_bytes=32 * 1024 * 1024,   # raise v5e's 16 MiB default
        ),
    )(p2d, dth, x_pad)

    coeffs = stats[:B, 0:2].reshape(B, 1, 2)
    r2 = stats[:B, 2:3]                          # (B, 1)
    x_hat = xhat_p[:B, :M].reshape(B, 1, M)
    res = res_p[:B, :M].reshape(B, 1, M)
    return ((coeffs, x_hat, res, r2), params)


def _reference_forward(x, t, params):
    """Pure-JAX mirror of VPFun_time.forward (uses jnp.linalg.pinv)."""
    r, ny = params[0], params[1]
    dt = t[1:] - t[:-1]
    inc = 0.5 * dt[None, None, :] * (x[..., 1:] + x[..., :-1])
    y_tail = jnp.cumsum(inc, axis=-1)                 # y[i] for i = 1..N-1
    u = ny + y_tail[:, 0, :]                          # (B, M)
    phi = jnp.stack([u, jnp.power(u, r)], axis=1)     # (B, 2, M)
    phip = jnp.linalg.pinv(phi)                       # (B, M, 2)
    xm = x[..., 1:]                                   # (B, 1, M)
    coeffs = xm @ phip
    x_hat = coeffs @ phi
    res = xm - x_hat
    r2 = (res ** 2).sum(axis=-1)
    return coeffs, x_hat, res, r2


if __name__ == "__main__":
    key = jax.random.PRNGKey(0)
    B, N = 4, 16

    # deterministic inputs; x > 0 and t increasing so (ny + cumsum) > 0 as the
    # torch module implicitly assumes (it takes fractional powers of it).
    x = jax.random.uniform(key, (B, 1, N), jnp.float32, minval=0.5, maxval=1.5)
    t = jnp.linspace(0.0, 4.0, N, dtype=jnp.float32)
    params = jnp.array([0.5, 1.0], dtype=jnp.float32)   # [r, ny]

    (coeffs, x_hat, res, r2), p_out = jax.block_until_ready(
        vp_layer_time_forward(x, t, params))

    # sanity check against the pure-JAX reference
    rc, rxh, rres, rr2 = _reference_forward(x, t, params)
    assert coeffs.shape == (B, 1, 2) and x_hat.shape == (B, 1, N - 1)
    assert res.shape == (B, 1, N - 1) and r2.shape == (B, 1)
    assert jnp.allclose(coeffs, rc, rtol=5e-2, atol=5e-3), "coeffs mismatch"
    assert jnp.allclose(x_hat, rxh, rtol=5e-2, atol=5e-3), "x_hat mismatch"
    assert jnp.allclose(res, rres, rtol=5e-2, atol=5e-3), "res mismatch"
    assert jnp.allclose(r2, rr2, rtol=5e-2, atol=5e-3), "r2 mismatch"
    assert jnp.allclose(p_out, params)

    print("KERNEL_OK")
</pallas_src>

<mosaic_0001>
module attributes {stable_mosaic.version = 11 : i64} {
  func.func @_vp_time_kernel(%arg0: i32, %arg1: memref<1x2xf32, #tpu.memory_space<smem>>, %arg2: memref<1x128xf32, #tpu.memory_space<vmem>>, %arg3: memref<8x128xf32, #tpu.memory_space<vmem>>, %arg4: memref<8x128xf32, #tpu.memory_space<vmem>>, %arg5: memref<8x128xf32, #tpu.memory_space<vmem>>, %arg6: memref<8x128xf32, #tpu.memory_space<vmem>>) attributes {dimension_semantics = [#tpu.dimension_semantics<parallel>], iteration_bounds = array<i64: 1>, scalar_prefetch = 0 : i64, scratch_operands = 0 : i64, tpu.core_type = #tpu.core_type<tc>, window_params = [{transform_indices = @transform_0, window_bounds = array<i64: 1, 2>}, {pipeline_mode = #tpu.pipeline_mode<synchronous>, transform_indices = @transform_1, window_bounds = array<i64: 1, 128>}, {transform_indices = @transform_2, window_bounds = array<i64: 8, 128>}, {transform_indices = @transform_3, window_bounds = array<i64: 8, 128>}, {transform_indices = @transform_4, window_bounds = array<i64: 8, 128>}, {transform_indices = @transform_5, window_bounds = array<i64: 8, 128>}]} {
    %c0 = arith.constant 0 : index
    %c0_0 = arith.constant 0 : index
    %0 = memref.load %arg1[%c0, %c0_0] : memref<1x2xf32, #tpu.memory_space<smem>>
    %c0_1 = arith.constant 0 : index
    %c1 = arith.constant 1 : index
    %1 = memref.load %arg1[%c0_1, %c1] : memref<1x2xf32, #tpu.memory_space<smem>>
    %c0_2 = arith.constant 0 : index
    %c0_3 = arith.constant 0 : index
    %2 = vector.load %arg3[%c0_2, %c0_3] : memref<8x128xf32, #tpu.memory_space<vmem>>, vector<8x128xf32>
    %c0_4 = arith.constant 0 : index
    %c0_5 = arith.constant 0 : index
    %3 = vector.load %arg2[%c0_4, %c0_5] : memref<1x128xf32, #tpu.memory_space<vmem>>, vector<1x128xf32>
    %4 = vector.extract_strided_slice %2 {offsets = [0, 1], sizes = [8, 127], strides = [1, 1]} : vector<8x128xf32> to vector<8x127xf32>
    %cst = arith.constant 0.000000e+00 : f32
    %5 = vector.broadcast %cst : f32 to vector<8x1xf32>
    %6 = tpu.concatenate %4, %5 in 1 : vector<8x127xf32>, vector<8x1xf32> -> vector<8x128xf32>
    %7 = arith.addf %2, %6 : vector<8x128xf32>
    %8 = vector.broadcast %3 : vector<1x128xf32> to vector<8x128xf32>
    %9 = arith.mulf %8, %7 : vector<8x128xf32>
    %10 = tpu.iota {dimensions = array<i32: 0>} : vector<128x128xi32>
    %11 = tpu.iota {dimensions = array<i32: 1>} : vector<128x128xi32>
    %12 = arith.cmpi sle, %10, %11 : vector<128x128xi32>
    %13 = arith.extui %12 : vector<128x128xi1> to vector<128x128xi32>
    %14 = arith.sitofp %13 : vector<128x128xi32> to vector<128x128xf32>
    %cst_6 = arith.constant dense<0.000000e+00> : vector<8x128xf32>
    %15 = tpu.matmul %9, %14, %cst_6 {dimension_numbers = #tpu.dot_dimension_numbers<[1], [0], [0], [1], [0, 0, 1, 1], [], []>} : vector<8x128xf32>, vector<128x128xf32>, vector<8x128xf32> -> vector<8x128xf32>
    %16 = tpu.iota {dimensions = array<i32: 1>} : vector<1x128xi32>
    %c15_i32 = arith.constant 15 : i32
    %17 = vector.broadcast %c15_i32 : i32 to vector<1x128xi32>
    %18 = arith.cmpi slt, %16, %17 : vector<1x128xi32>
    %19 = vector.broadcast %1 : f32 to vector<8x128xf32>
    %20 = arith.addf %19, %15 : vector<8x128xf32>
    %cst_7 = arith.constant 1.000000e+00 : f32
    %21 = vector.shape_cast %18 : vector<1x128xi1> to vector<1x128xi1>
    %22 = vector.broadcast %21 : vector<1x128xi1> to vector<8x128xi1>
    %23 = vector.broadcast %cst_7 : f32 to vector<8x128xf32>
    %24 = arith.select %22, %20, %23 : vector<8x128xi1>, vector<8x128xf32>
    %cst_8 = arith.constant 0.000000e+00 : f32
    %25 = vector.shape_cast %18 : vector<1x128xi1> to vector<1x128xi1>
    %26 = vector.broadcast %25 : vector<1x128xi1> to vector<8x128xi1>
    %27 = vector.broadcast %cst_8 : f32 to vector<8x128xf32>
    %28 = arith.select %26, %20, %27 : vector<8x128xi1>, vector<8x128xf32>
    %29 = vector.broadcast %0 : f32 to vector<8x128xf32>
    %30 = math.powf %24, %29 : vector<8x128xf32>
    %cst_9 = arith.constant 0.000000e+00 : f32
    %31 = vector.shape_cast %18 : vector<1x128xi1> to vector<1x128xi1>
    %32 = vector.broadcast %31 : vector<1x128xi1> to vector<8x128xi1>
    %33 = vector.broadcast %cst_9 : f32 to vector<8x128xf32>
    %34 = arith.select %32, %30, %33 : vector<8x128xi1>, vector<8x128xf32>
    %35 = arith.mulf %28, %28 : vector<8x128xf32>
    %cst_10 = arith.constant dense<0.000000e+00> : vector<8xf32>
    %36 = vector.multi_reduction <add>, %35, %cst_10 [1] : vector<8x128xf32> to vector<8xf32>
    %37 = vector.shape_cast %36 : vector<8xf32> to vector<8x1xf32>
    %38 = arith.mulf %28, %34 : vector<8x128xf32>
    %cst_11 = arith.constant dense<0.000000e+00> : vector<8xf32>
    %39 = vector.multi_reduction <add>, %38, %cst_11 [1] : vector<8x128xf32> to vector<8xf32>
    %40 = vector.shape_cast %39 : vector<8xf32> to vector<8x1xf32>
    %41 = arith.mulf %34, %34 : vector<8x128xf32>
    %cst_12 = arith.constant dense<0.000000e+00> : vector<8xf32>
    %42 = vector.multi_reduction <add>, %41, %cst_12 [1] : vector<8x128xf32> to vector<8xf32>
    %43 = vector.shape_cast %42 : vector<8xf32> to vector<8x1xf32>
    %44 = arith.mulf %6, %28 : vector<8x128xf32>
    %cst_13 = arith.constant dense<0.000000e+00> : vector<8xf32>
    %45 = vector.multi_reduction <add>, %44, %cst_13 [1] : vector<8x128xf32> to vector<8xf32>
    %46 = vector.shape_cast %45 : vector<8xf32> to vector<8x1xf32>
    %47 = arith.mulf %6, %34 : vector<8x128xf32>
    %cst_14 = arith.constant dense<0.000000e+00> : vector<8xf32>
    %48 = vector.multi_reduction <add>, %47, %cst_14 [1] : vector<8x128xf32> to vector<8xf32>
    %49 = vector.shape_cast %48 : vector<8xf32> to vector<8x1xf32>
    %50 = arith.mulf %37, %43 : vector<8x1xf32>
    %51 = arith.mulf %40, %40 : vector<8x1xf32>
    %52 = arith.subf %50, %51 : vector<8x1xf32>
    %cst_15 = arith.constant 0.000000e+00 : f32
    %53 = vector.broadcast %cst_15 : f32 to vector<8x1xf32>
    %54 = arith.cmpf oeq, %52, %53 : vector<8x1xf32>
    %cst_16 = arith.constant 1.000000e+00 : f32
    %55 = vector.broadcast %cst_16 : f32 to vector<8x1xf32>
    %56 = arith.select %54, %55, %52 : vector<8x1xi1>, vector<8x1xf32>
    %57 = tpu.reciprocal %56 {approx = true} : vector<8x1xf32> -> vector<8x1xf32>
    %58 = arith.mulf %43, %46 : vector<8x1xf32>
    %59 = arith.mulf %40, %49 : vector<8x1xf32>
    %60 = arith.subf %58, %59 : vector<8x1xf32>
    %61 = arith.mulf %60, %57 : vector<8x1xf32>
    %62 = arith.mulf %37, %49 : vector<8x1xf32>
    %63 = arith.mulf %40, %46 : vector<8x1xf32>
    %64 = arith.subf %62, %63 : vector<8x1xf32>
    %65 = arith.mulf %64, %57 : vector<8x1xf32>
    %66 = vector.broadcast %61 : vector<8x1xf32> to vector<8x128xf32>
    %67 = arith.mulf %66, %28 : vector<8x128xf32>
    %68 = vector.broadcast %65 : vector<8x1xf32> to vector<8x128xf32>
    %69 = arith.mulf %68, %34 : vector<8x128xf32>
    %70 = arith.addf %67, %69 : vector<8x128xf32>
    %71 = arith.subf %6, %70 : vector<8x128xf32>
    %72 = arith.mulf %71, %71 : vector<8x128xf32>
    %cst_17 = arith.constant dense<0.000000e+00> : vector<8xf32>
    %73 = vector.multi_reduction <add>, %72, %cst_17 [1] : vector<8x128xf32> to vector<8xf32>
    %74 = vector.shape_cast %73 : vector<8xf32> to vector<8x1xf32>
    %c0_18 = arith.constant 0 : index
    %c0_19 = arith.constant 0 : index
    %75 = vector.load %arg4[%c0_18, %c0_19] : memref<8x128xf32, #tpu.memory_space<vmem>>, vector<8x128xf32>
    tpu.vector_store %arg4[%c0_18, %c0_19], %70 {strides = array<i32>} : memref<8x128xf32, #tpu.memory_space<vmem>>, vector<8x128xf32>,
    %c0_20 = arith.constant 0 : index
    %c0_21 = arith.constant 0 : index
    %76 = vector.load %arg5[%c0_20, %c0_21] : memref<8x128xf32, #tpu.memory_space<vmem>>, vector<8x128xf32>
    tpu.vector_store %arg5[%c0_20, %c0_21], %71 {strides = array<i32>} : memref<8x128xf32, #tpu.memory_space<vmem>>, vector<8x128xf32>,
    %77 = tpu.iota {dimensions = array<i32: 1>} : vector<1x128xi32>
    %c0_i32 = arith.constant 0 : i32
    %78 = vector.broadcast %c0_i32 : i32 to vector<1x128xi32>
    %79 = arith.cmpi eq, %77, %78 : vector<1x128xi32>
    %cst_22 = arith.constant 0.000000e+00 : f32
    %80 = vector.shape_cast %79 : vector<1x128xi1> to vector<1x128xi1>
    %81 = vector.broadcast %80 : vector<1x128xi1> to vector<8x128xi1>
    %82 = vector.shape_cast %61 : vector<8x1xf32> to vector<8x1xf32>
    %83 = vector.broadcast %82 : vector<8x1xf32> to vector<8x128xf32>
    %84 = vector.broadcast %cst_22 : f32 to vector<8x128xf32>
    %85 = arith.select %81, %83, %84 : vector<8x128xi1>, vector<8x128xf32>
    %c1_i32 = arith.constant 1 : i32
    %86 = vector.broadcast %c1_i32 : i32 to vector<1x128xi32>
    %87 = arith.cmpi eq, %77, %86 : vector<1x128xi32>
    %cst_23 = arith.constant 0.000000e+00 : f32
    %88 = vector.shape_cast %87 : vector<1x128xi1> to vector<1x128xi1>
    %89 = vector.broadcast %88 : vector<1x128xi1> to vector<8x128xi1>
    %90 = vector.shape_cast %65 : vector<8x1xf32> to vector<8x1xf32>
    %91 = vector.broadcast %90 : vector<8x1xf32> to vector<8x128xf32>
    %92 = vector.broadcast %cst_23 : f32 to vector<8x128xf32>
    %93 = arith.select %89, %91, %92 : vector<8x128xi1>, vector<8x128xf32>
    %94 = arith.addf %85, %93 : vector<8x128xf32>
    %c2_i32 = arith.constant 2 : i32
    %95 = vector.broadcast %c2_i32 : i32 to vector<1x128xi32>
    %96 = arith.cmpi eq, %77, %95 : vector<1x128xi32>
    %cst_24 = arith.constant 0.000000e+00 : f32
    %97 = vector.shape_cast %96 : vector<1x128xi1> to vector<1x128xi1>
    %98 = vector.broadcast %97 : vector<1x128xi1> to vector<8x128xi1>
    %99 = vector.shape_cast %74 : vector<8x1xf32> to vector<8x1xf32>
    %100 = vector.broadcast %99 : vector<8x1xf32> to vector<8x128xf32>
    %101 = vector.broadcast %cst_24 : f32 to vector<8x128xf32>
    %102 = arith.select %98, %100, %101 : vector<8x128xi1>, vector<8x128xf32>
    %103 = arith.addf %94, %102 : vector<8x128xf32>
    %c0_25 = arith.constant 0 : index
    %c0_26 = arith.constant 0 : index
    %104 = vector.load %arg6[%c0_25, %c0_26] : memref<8x128xf32, #tpu.memory_space<vmem>>, vector<8x128xf32>
    tpu.vector_store %arg6[%c0_25, %c0_26], %103 {strides = array<i32>} : memref<8x128xf32, #tpu.memory_space<vmem>>, vector<8x128xf32>,
    return
  }
  func.func @transform_0(%arg0: i32) -> (i32, i32) {
    %c0_i32 = arith.constant 0 : i32
    %c0_i32_0 = arith.constant 0 : i32
    %c0_i32_1 = arith.constant 0 : i32
    return %c0_i32, %c0_i32_0 : i32, i32
  }
  func.func @transform_1(%arg0: i32) -> (i32, i32) {
    %c0_i32 = arith.constant 0 : i32
    %c0_i32_0 = arith.constant 0 : i32
    %c0_i32_1 = arith.constant 0 : i32
    return %c0_i32, %c0_i32_0 : i32, i32
  }
  func.func @transform_2(%arg0: i32) -> (i32, i32) {
    %c0_i32 = arith.constant 0 : i32
    %c0_i32_0 = arith.constant 0 : i32
    return %arg0, %c0_i32 : i32, i32
  }
  func.func @transform_3(%arg0: i32) -> (i32, i32) {
    %c0_i32 = arith.constant 0 : i32
    %c0_i32_0 = arith.constant 0 : i32
    return %arg0, %c0_i32 : i32, i32
  }
  func.func @transform_4(%arg0: i32) -> (i32, i32) {
    %c0_i32 = arith.constant 0 : i32
    %c0_i32_0 = arith.constant 0 : i32
    return %arg0, %c0_i32 : i32, i32
  }
  func.func @transform_5(%arg0: i32) -> (i32, i32) {
    %c0_i32 = arith.constant 0 : i32
    %c0_i32_0 = arith.constant 0 : i32
    return %arg0, %c0_i32 : i32, i32
  }
}

</mosaic_0001>

<llo_original>
// kernel: vp_layer_time_forward.1
$region0: #{vp_layer_time_forward.1}
  #allocation0 [shape = 'u32[]', space=smem, size = 0x4, offset = 0x4, fixed_abs, tag = 'smem constant byte address 0x4 - core index']
  #allocation1 [shape = 'u32[144,128]{1,0:T(1,128)}', space=vmem, size = 0x12000, scoped, tag = 'internal scratch']
  %s0 = inlined_call_operand.vmem [shape: f32[1,2], index: 0, kind: input, shape index: {}]
  %s1 = inlined_call_operand.vmem [shape: f32[1,128], index: 1, kind: input, shape index: {}]
  %s2 = inlined_call_operand.vmem [shape: f32[8,128], index: 2, kind: input, shape index: {}]
  %s3 = inlined_call_operand.vmem [shape: f32[8,128], index: 3, kind: output, shape index: {0}]
  %s4 = inlined_call_operand.vmem [shape: f32[8,128], index: 4, kind: output, shape index: {1}]
  %s5 = inlined_call_operand.vmem [shape: f32[8,128], index: 5, kind: output, shape index: {2}]
  %6 = xla_tuple %s3, %s4, %s5
  %s7 = sld [smem:[#allocation0]]
  $region42: #{vp_layer_time_forward.1} parent=0
    _
  %s9 = ssub.s32 1, %s7
  %s10 = scalar_select 0, %s9, %s7
  $region1: #{vp_layer_time_forward.1} parent=0
    #allocation2 [shape = 'u8[512]{0}', space=smem, size = 0x200, scoped, tag = 'input window, operand 0, single buffered']
    #allocation3 [shape = 's32[1]{0}', space=sflag, size = 0x4, scoped, tag = 'scoped memory for vp_layer_time_forward.1']
    %11 = vsyncpa [#allocation3], 0
    // Predicated region
    $region2: #{vp_layer_time_forward.1} parent=1 // pred_check
      _
    $region3: #{vp_layer_time_forward.1} parent=1 // pred_check_branch
      %13 = sbr.rel (0) target = $region5
    $region4: #{vp_layer_time_forward.1} parent=1 // pred_region
      %s15 = ssub.s32 16, 16
      %16 = vsyncadd [#allocation3], %s15
      %s18 = sshll.u32 %s0, 4
      %s19 = int_to_ptr.vmem [resolvable:$true] %s18
      %21 = dma.vmem_to_smem %s19, 16, [#allocation2], [#allocation3]
    $region5: #{vp_layer_time_forward.1} parent=1 // pred_fallthru
      _
    // Predicated region
    $region6: #{vp_layer_time_forward.1} parent=1 // pred_check
      _
    $region7: #{vp_layer_time_forward.1} parent=1 // pred_check_branch
      %23 = sbr.rel (0) target = $region9
    $region8: #{vp_layer_time_forward.1} parent=1 // pred_region
      _
    $region9: #{vp_layer_time_forward.1} parent=1 // pred_fallthru
      _
    // Predicated region
    $region10: #{vp_layer_time_forward.1} parent=1 // pred_check
      _
    $region11: #{vp_layer_time_forward.1} parent=1 // pred_check_branch
      %25 = sbr.rel (0) target = $region13
    $region12: #{vp_layer_time_forward.1} parent=1 // pred_region
      _
    $region13: #{vp_layer_time_forward.1} parent=1 // pred_fallthru
      _
    // Predicated region
    $region14: #{vp_layer_time_forward.1} parent=1 // pred_check
      _
    $region15: #{vp_layer_time_forward.1} parent=1 // pred_check_branch
      %27 = sbr.rel (0) target = $region17
    $region16: #{vp_layer_time_forward.1} parent=1 // pred_region
      %28 = dma.done [#allocation3], 16
    $region17: #{vp_layer_time_forward.1} parent=1 // pred_fallthru
      _
    %29 = sfence
    %s30 = sld [smem:[#allocation2]]
    %s31 = sld [smem:[#allocation2 + $0x1]]
    %v32 = vld [vmem:[%s2] sm:$0xff]
    %v33 = vld [vmem:[%s1] sm:$0x1]
    %35 = vrot.lane.b32.xlu0 %v32, 127
    %v36 = vpop.permute.xlu0 %35
    %vm38 = vcmask 1039360
    %v39 = vsel %vm38, %v36, 0.0
    %v40 = vadd.f32 %v32, %v39
    %v42 = vlaneseq
    %v43 = vshrl.u32 %v42, 7
    %v44 = vsub.s32 0, %v43
    %v45 = vrot.slane %v33, %v44
    %v47 = vmul.f32 %v45, %v40
    %v48 = vlaneseq
    %v49 = vshrl.u32 %v48, 7
    %v50 = vadd.s32 %v49, 8
    %v51 = vadd.s32 %v49, 16
    %v52 = vadd.s32 %v49, 24
    %v53 = vadd.s32 %v49, 32
    %v54 = vadd.s32 %v49, 40
    %v55 = vadd.s32 %v49, 48
    %v56 = vadd.s32 %v49, 56
    %v57 = vadd.s32 %v49, 64
    %v58 = vadd.s32 %v49, 72
    %v59 = vadd.s32 %v49, 80
    %v60 = vadd.s32 %v49, 88
    %v61 = vadd.s32 %v49, 96
    %v62 = vadd.s32 %v49, 104
    %v63 = vadd.s32 %v49, 112
    %v64 = vadd.s32 %v49, 120
    %v65 = vlaneseq
    %v66 = vand.u32 %v65, 127
    %vm67 = vcmp.le.s32.totalorder %v49, %v66
    %vm68 = vcmp.le.s32.totalorder %v50, %v66
    %vm69 = vcmp.le.s32.totalorder %v51, %v66
    %vm70 = vcmp.le.s32.totalorder %v52, %v66
    %vm71 = vcmp.le.s32.totalorder %v53, %v66
    %vm72 = vcmp.le.s32.totalorder %v54, %v66
    %vm73 = vcmp.le.s32.totalorder %v55, %v66
    %vm74 = vcmp.le.s32.totalorder %v56, %v66
    %vm75 = vcmp.le.s32.totalorder %v57, %v66
    %vm76 = vcmp.le.s32.totalorder %v58, %v66
    %vm77 = vcmp.le.s32.totalorder %v59, %v66
    %vm78 = vcmp.le.s32.totalorder %v60, %v66
    %vm79 = vcmp.le.s32.totalorder %v61, %v66
    %vm80 = vcmp.le.s32.totalorder %v62, %v66
    %vm81 = vcmp.le.s32.totalorder %v63, %v66
    %vm82 = vcmp.le.s32.totalorder %v64, %v66
    %v83 = vsel %vm67, 1, 0
    %v84 = vsel %vm68, 1, 0
    %v85 = vsel %vm69, 1, 0
    %v86 = vsel %vm70, 1, 0
    %v87 = vsel %vm71, 1, 0
    %v88 = vsel %vm72, 1, 0
    %v89 = vsel %vm73, 1, 0
    %v90 = vsel %vm74, 1, 0
    %v91 = vsel %vm75, 1, 0
    %v92 = vsel %vm76, 1, 0
    %v93 = vsel %vm77, 1, 0
    %v94 = vsel %vm78, 1, 0
    %v95 = vsel %vm79, 1, 0
    %v96 = vsel %vm80, 1, 0
    %v97 = vsel %vm81, 1, 0
    %v98 = vsel %vm82, 1, 0
    %v99 = vcvt.s32.f32 %v83
    %v100 = vcvt.s32.f32 %v84
    %v101 = vcvt.s32.f32 %v85
    %v102 = vcvt.s32.f32 %v86
    %v103 = vcvt.s32.f32 %v87
    %v104 = vcvt.s32.f32 %v88
    %v105 = vcvt.s32.f32 %v89
    %v106 = vcvt.s32.f32 %v90
    %v107 = vcvt.s32.f32 %v91
    %v108 = vcvt.s32.f32 %v92
    %v109 = vcvt.s32.f32 %v93
    %v110 = vcvt.s32.f32 %v94
    %v111 = vcvt.s32.f32 %v95
    %v112 = vcvt.s32.f32 %v96
    %v113 = vcvt.s32.f32 %v97
    %v114 = vcvt.s32.f32 %v98
    %115 = vmatprep.subr.mxu0 0.0
    %116 = vmatpush1.msra.mxu0 %v99
    %117 = vmatprep.subr.mxu0 0.0
    %118 = vmatpush1.msra.mxu0 %v100
    %119 = vmatprep.subr.mxu0 0.0
    %120 = vmatpush1.msra.mxu0 %v101
    %121 = vmatprep.subr.mxu0 0.0
    %122 = vmatpush1.msra.mxu0 %v102
    %123 = vmatprep.subr.mxu0 0.0
    %124 = vmatpush1.msra.mxu0 %v103
    %125 = vmatprep.subr.mxu0 0.0
    %126 = vmatpush1.msra.mxu0 %v104
    %127 = vmatprep.subr.mxu0 0.0
    %128 = vmatpush1.msra.mxu0 %v105
    %129 = vmatprep.subr.mxu0 0.0
    %130 = vmatpush1.msra.mxu0 %v106
    %131 = vmatprep.subr.mxu0 0.0
    %132 = vmatpush1.msra.mxu0 %v107
    %133 = vmatprep.subr.mxu0 0.0
    %134 = vmatpush1.msra.mxu0 %v108
    %135 = vmatprep.subr.mxu0 0.0
    %136 = vmatpush1.msra.mxu0 %v109
    %137 = vmatprep.subr.mxu0 0.0
    %138 = vmatpush1.msra.mxu0 %v110
    %139 = vmatprep.subr.mxu0 0.0
    %140 = vmatpush1.msra.mxu0 %v111
    %141 = vmatprep.subr.mxu0 0.0
    %142 = vmatpush1.msra.mxu0 %v112
    %143 = vmatprep.subr.mxu0 0.0
    %144 = vmatpush1.msra.mxu0 %v113
    %145 = vmatprep.subr.mxu0 0.0
    %146 = vmatpush1.msra.mxu0 %v114
    %147 = vmatprep.subr.mxu0 0.0
    %148 = vmatpush1.msra.mxu0 0.0
    %149 = vmatprep.subr.mxu0 0.0
    %150 = vmatpush1.msra.mxu0 0.0
    %151 = vmatprep.subr.mxu0 0.0
    %152 = vmatpush1.msra.mxu0 0.0
    %153 = vmatprep.subr.mxu0 0.0
    %154 = vmatpush1.msra.mxu0 0.0
    %155 = vmatprep.subr.mxu0 0.0
    %156 = vmatpush1.msra.mxu0 0.0
    %157 = vmatprep.subr.mxu0 0.0
    %158 = vmatpush1.msra.mxu0 0.0
    %159 = vmatprep.subr.mxu0 0.0
    %160 = vmatpush1.msra.mxu0 0.0
    %161 = vmatprep.subr.mxu0 0.0
    %162 = vmatpush1.msra.mxu0 0.0
    %163 = vmatprep.subr.mxu0 0.0
    %164 = vmatpush1.msra.mxu0 0.0
    %165 = vmatprep.subr.mxu0 0.0
    %166 = vmatpush1.msra.mxu0 0.0
    %167 = vmatprep.subr.mxu0 0.0
    %168 = vmatpush1.msra.mxu0 0.0
    %169 = vmatprep.subr.mxu0 0.0
    %170 = vmatpush1.msra.mxu0 0.0
    %171 = vmatprep.subr.mxu0 0.0
    %172 = vmatpush1.msra.mxu0 0.0
    %173 = vmatprep.subr.mxu0 0.0
    %174 = vmatpush1.msra.mxu0 0.0
    %175 = vmatprep.subr.mxu0 0.0
    %176 = vmatpush1.msra.mxu0 0.0
    %177 = vmatprep.subr.mxu0 0.0
    %178 = vmatpush1.msra.mxu0 0.0
    %179 = vmatprep.mubr.f32.mxu0 0.0
    %180 = vmatmul.mubr.f32.gmra.mrb[0].mxu0 %v47
    %v181 = vpop.f32.mrb[0].mxu0
    %v182 = vadd.f32 0.0, %v181
    %v183 = vpop.f32.mrb[0].mxu0
    %184 = vdwg.mxu0
    %vm185 = vcmp.lt.s32.totalorder %v66, 15
    %v186 = vstv %s31
    %v187 = vadd.f32 %v186, %v182
    %v188 = vsel %vm185, 1, 0
    %vm189 = vcmp.eq.s32.totalorder %v188, 1
    %v190 = vsel %vm189, %v187, 1.0
    %v191 = vsel %vm189, %v187, 0.0
    %v192 = vstv %s30
    %v193 = vpow.f32 %v190, %v192
    %v194 = vsel %vm189, %v193, 0.0
    %v195 = vmul.f32 %v191, %v191
    %196 = vadd.xlane.f32.xlu0 %v195
    %v197 = vpop.xlane.xlu0 %196
    %v198 = vmul.f32 %v191, %v194
    %199 = vadd.xlane.f32.xlu0 %v198
    %v200 = vpop.xlane.xlu0 %199
    %v201 = vmul.f32 %v194, %v194
    %202 = vadd.xlane.f32.xlu0 %v201
    %v203 = vpop.xlane.xlu0 %202
    %v204 = vmul.f32 %v39, %v191
    %205 = vadd.xlane.f32.xlu0 %v204
    %v206 = vpop.xlane.xlu0 %205
    %v207 = vmul.f32 %v39, %v194
    %208 = vadd.xlane.f32.xlu0 %v207
    %v209 = vpop.xlane.xlu0 %208
    %v210 = vmul.f32 %v197, %v203
    %v211 = vmul.f32 %v200, %v200
    %v212 = vsub.f32 %v210, %v211
    %vm213 = vcmp.eq.f32.partialorder %v212, 0.0
    %v214 = vsel %vm213, 1.0, %v212
    %v215 = vrcp.pop %v214
    %v216 = vmul.f32 %v203, %v206
    %v217 = vmul.f32 %v200, %v209
    %v218 = vsub.f32 %v216, %v217
    %v219 = vmul.f32 %v218, %v215
    %v220 = vmul.f32 %v197, %v209
    %v221 = vmul.f32 %v200, %v206
    %v222 = vsub.f32 %v220, %v221
    %v223 = vmul.f32 %v222, %v215
    %v224 = vmul.f32 %v219, %v191
    %v225 = vmul.f32 %v223, %v194
    %v226 = vadd.f32 %v224, %v225
    %v227 = vsub.f32 %v39, %v226
    %v228 = vmul.f32 %v227, %v227
    %229 = vadd.xlane.f32.xlu0 %v228
    %v230 = vpop.xlane.xlu0 %229
    %231 = vst [vmem:[%s3] sm:$0xff] %v226
    %232 = vst [vmem:[%s4] sm:$0xff] %v227
    %vm233 = vcmp.eq.s32.totalorder %v66, 0
    %v234 = vsel %vm233, 1, 0
    %vm235 = vcmp.eq.s32.totalorder %v234, 1
    %v236 = vsel %vm235, %v219, 0.0
    %vm237 = vcmp.eq.s32.totalorder %v66, 1
    %v238 = vsel %vm237, 1, 0
    %vm239 = vcmp.eq.s32.totalorder %v238, 1
    %v240 = vsel %vm239, %v223, 0.0
    %v241 = vadd.f32 %v236, %v240
    %vm242 = vcmp.eq.s32.totalorder %v66, 2
    %v243 = vsel %vm242, 1, 0
    %vm244 = vcmp.eq.s32.totalorder %v243, 1
    %v245 = vsel %vm244, %v230, 0.0
    %v246 = vadd.f32 %v241, %v245
    %247 = vst [vmem:[%s5] sm:$0xff] %v246
    // Predicated region
    $region18: #{vp_layer_time_forward.1} parent=1 // pred_check
      _
    $region19: #{vp_layer_time_forward.1} parent=1 // pred_check_branch
      %249 = sbr.rel (0) target = $region21
    $region20: #{vp_layer_time_forward.1} parent=1 // pred_region
      _
    $region21: #{vp_layer_time_forward.1} parent=1 // pred_fallthru
      _
    // Predicated region
    $region22: #{vp_layer_time_forward.1} parent=1 // pred_check
      _
    $region23: #{vp_layer_time_forward.1} parent=1 // pred_check_branch
      %251 = sbr.rel (0) target = $region25
    $region24: #{vp_layer_time_forward.1} parent=1 // pred_region
      _
    $region25: #{vp_layer_time_forward.1} parent=1 // pred_fallthru
      _
    // Predicated region
    $region26: #{vp_layer_time_forward.1} parent=1 // pred_check
      _
    $region27: #{vp_layer_time_forward.1} parent=1 // pred_check_branch
      %253 = sbr.rel (0) target = $region29
    $region28: #{vp_layer_time_forward.1} parent=1 // pred_region
      _
    $region29: #{vp_layer_time_forward.1} parent=1 // pred_fallthru
      _
    // Predicated region
    $region30: #{vp_layer_time_forward.1} parent=1 // pred_check
      _
    $region31: #{vp_layer_time_forward.1} parent=1 // pred_check_branch
      %255 = sbr.rel (0) target = $region33
    $region32: #{vp_layer_time_forward.1} parent=1 // pred_region
      _
    $region33: #{vp_layer_time_forward.1} parent=1 // pred_fallthru
      _
    // Predicated region
    $region34: #{vp_layer_time_forward.1} parent=1 // pred_check
      _
    $region35: #{vp_layer_time_forward.1} parent=1 // pred_check_branch
      %257 = sbr.rel (0) target = $region37
    $region36: #{vp_layer_time_forward.1} parent=1 // pred_region
      _
    $region37: #{vp_layer_time_forward.1} parent=1 // pred_fallthru
      _
    // Predicated region
    $region38: #{vp_layer_time_forward.1} parent=1 // pred_check
      _
    $region39: #{vp_layer_time_forward.1} parent=1 // pred_check_branch
      %259 = sbr.rel (0) target = $region41
    $region40: #{vp_layer_time_forward.1} parent=1 // pred_region
      _
    $region41: #{vp_layer_time_forward.1} parent=1 // pred_fallthru
      _
    %260 = vsyncpa [#allocation3], 1

</llo_original>
